<compile_context>
chip_gen: v7x
topology: tpu7x:2x2x1
jax: 0.10.0
libtpu: 0.0.40
codegen_flags: <defaults>
</compile_context>

<pallas_src>
import functools

import jax
import jax.numpy as jnp
from jax.experimental import pallas as pl
from jax.experimental.pallas import tpu as pltpu


# ------------------------------ kernels ------------------------------------


def _sp_loss_none_kernel(x_ref, t_ref, o_ref):
    # Elementwise relu(x - t) on the VPU; tile shape (TB, C).
    o_ref[...] = jnp.maximum(x_ref[...] - t_ref[...], 0.0).astype(o_ref.dtype)


def _sp_loss_reduce_kernel(x_ref, t_ref, o_ref, *, scale):
    # Fused relu(x - t) + full reduction.  o_ref is a (1, 1) f32 accumulator
    # that stays VMEM-resident across the reduction grid axis (constant
    # index_map).  `scale` is 1.0 for 'sum' and 1/numel for 'elementwise_mean'
    # and is applied once on the last grid step.
    @pl.when(pl.program_id(0) == 0)
    def _():
        o_ref[...] = jnp.zeros_like(o_ref)

    diff = x_ref[...].astype(jnp.float32) - t_ref[...].astype(jnp.float32)
    o_ref[...] += jnp.sum(jnp.maximum(diff, 0.0))

    @pl.when(pl.program_id(0) == pl.num_programs(0) - 1)
    def _():
        o_ref[...] = o_ref[...] * jnp.float32(scale)


# ------------------------------ wrapper -------------------------------------


def _flatten_2d(x):
    if x.ndim == 0:
        return x.reshape(1, 1)
    if x.ndim == 1:
        return x.reshape(1, -1)
    return x.reshape(-1, x.shape[-1])


def _pick_row_tile(rows, cols, itemsize, target_bytes=2 << 20):
    """Row tile ~target_bytes per input tile, multiple of 8, <= rows."""
    tb = max(1, target_bytes // max(1, cols * itemsize))
    if tb >= rows:
        return rows                      # full extent: always a legal block dim
    tb = max(8, (tb // 8) * 8)           # keep sublane alignment when tiling
    return min(tb, rows)


def structured_perceptron_loss(inputs, target, reduction="elementwise_mean"):
    """relu(inputs - target) with optional mean/sum reduction, via Pallas."""
    assert inputs.shape == target.shape, "input/target shape mismatch"
    orig_shape = inputs.shape
    x2 = _flatten_2d(inputs)
    t2 = _flatten_2d(target)
    R, C = x2.shape
    numel = R * C

    TB = _pick_row_tile(R, C, jnp.dtype(inputs.dtype).itemsize)
    Rp = ((R + TB - 1) // TB) * TB
    if Rp != R:
        pad = Rp - R
        x2 = jnp.pad(x2, ((0, pad), (0, 0)))
        t2 = jnp.pad(t2, ((0, pad), (0, 0)))
    grid = (Rp // TB,)

    if reduction == "none":
        out = pl.pallas_call(
            _sp_loss_none_kernel,
            out_shape=jax.ShapeDtypeStruct((Rp, C), inputs.dtype),
            grid=grid,
            in_specs=[
                pl.BlockSpec((TB, C), lambda i: (i, 0)),
                pl.BlockSpec((TB, C), lambda i: (i, 0)),
            ],
            out_specs=pl.BlockSpec((TB, C), lambda i: (i, 0)),
            compiler_params=pltpu.CompilerParams(
                dimension_semantics=("parallel",)),
        )(x2, t2)
        return out[:R].reshape(orig_shape)

    # sum / elementwise_mean: fused streaming reduction, scalar accumulator.
    scale = 1.0 / numel if reduction == "elementwise_mean" else 1.0
    kernel = functools.partial(_sp_loss_reduce_kernel, scale=scale)
    total = pl.pallas_call(
        kernel,
        out_shape=jax.ShapeDtypeStruct((1, 1), jnp.float32),
        grid=grid,
        in_specs=[
            pl.BlockSpec((TB, C), lambda i: (i, 0)),
            pl.BlockSpec((TB, C), lambda i: (i, 0)),
        ],
        out_specs=pl.BlockSpec((1, 1), lambda i: (0, 0)),
        compiler_params=pltpu.CompilerParams(
            dimension_semantics=("arbitrary",)),
    )(x2, t2)[0, 0]

    return total.astype(inputs.dtype)


class StructuredPerceptronLoss:
    """JAX/Pallas port of the PyTorch StructuredPerceptronLoss module."""

    def __init__(self, size_average=None, reduce=None,
                 reduction="elementwise_mean"):
        if size_average is not None or reduce is not None:
            # torch _Reduction.legacy_get_string semantics (defaults True).
            size_average = True if size_average is None else size_average
            reduce = True if reduce is None else reduce
            if size_average and reduce:
                self.reduction = "elementwise_mean"
            elif reduce:
                self.reduction = "sum"
            else:
                self.reduction = "none"
        else:
            self.reduction = reduction

    def __call__(self, inputs, target):
        return structured_perceptron_loss(inputs, target, self.reduction)


if __name__ == "__main__":
    key = jax.random.PRNGKey(0)
    k_x, k_t = jax.random.split(key)

    # Small rank-4 input consistent with a generic loss module.
    shape = (2, 4, 16, 16)
    x = jax.random.normal(k_x, shape, dtype=jnp.float32)
    t = jax.random.normal(k_t, shape, dtype=jnp.float32)

    ref_none = jnp.maximum(x - t, 0.0)
    refs = {
        "none": ref_none,
        "elementwise_mean": ref_none.mean(),
        "sum": ref_none.sum(),
    }

    ok = True
    for red in ("none", "elementwise_mean", "sum"):
        loss_fn = StructuredPerceptronLoss(reduction=red)
        out = jax.block_until_ready(loss_fn(x, t))
        ref = refs[red]
        if out.shape != ref.shape or not jnp.allclose(out, ref,
                                                      atol=1e-4, rtol=1e-5):
            ok = False

    # Also exercise the legacy size_average/reduce constructor path.
    legacy = StructuredPerceptronLoss(size_average=False, reduce=True)
    out_legacy = jax.block_until_ready(legacy(x, t))
    if not jnp.allclose(out_legacy, refs["sum"], atol=1e-4, rtol=1e-5):
        ok = False

    if ok:
        print("KERNEL_OK")
</pallas_src>

<mosaic_0001>
module attributes {stable_mosaic.version = 11 : i64} {
  func.func @_sp_loss_none_kernel(%arg0: i32, %arg1: memref<128x16xf32, #tpu.memory_space<vmem>>, %arg2: memref<128x16xf32, #tpu.memory_space<vmem>>, %arg3: memref<128x16xf32, #tpu.memory_space<vmem>>) attributes {dimension_semantics = [#tpu.dimension_semantics<parallel>], iteration_bounds = array<i64: 1>, scalar_prefetch = 0 : i64, scratch_operands = 0 : i64, tpu.core_type = #tpu.core_type<tc>, window_params = [{transform_indices = @transform_0, window_bounds = array<i64: 128, 16>}, {transform_indices = @transform_1, window_bounds = array<i64: 128, 16>}, {transform_indices = @transform_2, window_bounds = array<i64: 128, 16>}]} {
    %c0 = arith.constant 0 : index
    %c0_0 = arith.constant 0 : index
    %0 = vector.load %arg1[%c0, %c0_0] : memref<128x16xf32, #tpu.memory_space<vmem>>, vector<128x16xf32>
    %c0_1 = arith.constant 0 : index
    %c0_2 = arith.constant 0 : index
    %1 = vector.load %arg2[%c0_1, %c0_2] : memref<128x16xf32, #tpu.memory_space<vmem>>, vector<128x16xf32>
    %2 = arith.subf %0, %1 : vector<128x16xf32>
    %cst = arith.constant 0.000000e+00 : f32
    %3 = vector.broadcast %cst : f32 to vector<128x16xf32>
    %4 = arith.maximumf %2, %3 : vector<128x16xf32>
    %c0_3 = arith.constant 0 : index
    %c0_4 = arith.constant 0 : index
    %5 = vector.load %arg3[%c0_3, %c0_4] : memref<128x16xf32, #tpu.memory_space<vmem>>, vector<128x16xf32>
    tpu.vector_store %arg3[%c0_3, %c0_4], %4 {strides = array<i32>} : memref<128x16xf32, #tpu.memory_space<vmem>>, vector<128x16xf32>,
    return
  }
  func.func @transform_0(%arg0: i32) -> (i32, i32) {
    %c0_i32 = arith.constant 0 : i32
    %c0_i32_0 = arith.constant 0 : i32
    return %arg0, %c0_i32 : i32, i32
  }
  func.func @transform_1(%arg0: i32) -> (i32, i32) {
    %c0_i32 = arith.constant 0 : i32
    %c0_i32_0 = arith.constant 0 : i32
    return %arg0, %c0_i32 : i32, i32
  }
  func.func @transform_2(%arg0: i32) -> (i32, i32) {
    %c0_i32 = arith.constant 0 : i32
    %c0_i32_0 = arith.constant 0 : i32
    return %arg0, %c0_i32 : i32, i32
  }
}

</mosaic_0001>

<llo_original>
// kernel: tpu_custom_call.1
$region0: #{tpu_custom_call.1}
  #allocation0 [shape = 'u32[]', space=smem, size = 0x4, offset = 0x4, fixed_abs, tag = 'smem constant byte address 0x4 - core index']
  #allocation1 [shape = 'u32[144,128]{1,0:T(1,128)}', space=vmem, size = 0x12000, scoped, tag = 'internal scratch']
  %s0 = inlined_call_operand.vmem [shape: f32[128,16], index: 0, kind: input, shape index: {}]
  %s1 = inlined_call_operand.vmem [shape: f32[128,16], index: 1, kind: input, shape index: {}]
  %s2 = inlined_call_operand.vmem [shape: f32[128,16], index: 2, kind: output, shape index: {}]
  %s3 = sld [smem:[#allocation0]]
  $region18: #{tpu_custom_call.1} parent=0
    _
  %s5 = ssub.s32 1, %s3
  %s6 = scalar_select 0, %s5, %s3
  // Predicated region
  $region2: #{tpu_custom_call.1} parent=0 // pred_check
    _
  $region3: #{tpu_custom_call.1} parent=0 // pred_check_branch
    %8 = sbr.rel (0) target = $region5
  $region4: #{tpu_custom_call.1} parent=0 // pred_region
    _
  $region5: #{tpu_custom_call.1} parent=0 // pred_fallthru
    _
  // Predicated region
  $region6: #{tpu_custom_call.1} parent=0 // pred_check
    _
  $region7: #{tpu_custom_call.1} parent=0 // pred_check_branch
    %10 = sbr.rel (0) target = $region9
  $region8: #{tpu_custom_call.1} parent=0 // pred_region
    _
  $region9: #{tpu_custom_call.1} parent=0 // pred_fallthru
    _
  %v11 = vld [vmem:[%s0] sm:$0xff]
  %v12 = vld [vmem:[%s0 + $0x8] sm:$0xff]
  %v13 = vld [vmem:[%s0 + $0x10] sm:$0xff]
  %v14 = vld [vmem:[%s0 + $0x18] sm:$0xff]
  %v15 = vld [vmem:[%s0 + $0x20] sm:$0xff]
  %v16 = vld [vmem:[%s0 + $0x28] sm:$0xff]
  %v17 = vld [vmem:[%s0 + $0x30] sm:$0xff]
  %v18 = vld [vmem:[%s0 + $0x38] sm:$0xff]
  %v19 = vld [vmem:[%s0 + $0x40] sm:$0xff]
  %v20 = vld [vmem:[%s0 + $0x48] sm:$0xff]
  %v21 = vld [vmem:[%s0 + $0x50] sm:$0xff]
  %v22 = vld [vmem:[%s0 + $0x58] sm:$0xff]
  %v23 = vld [vmem:[%s0 + $0x60] sm:$0xff]
  %v24 = vld [vmem:[%s0 + $0x68] sm:$0xff]
  %v25 = vld [vmem:[%s0 + $0x70] sm:$0xff]
  %v26 = vld [vmem:[%s0 + $0x78] sm:$0xff]
  %v27 = vld [vmem:[%s1] sm:$0xff]
  %v28 = vld [vmem:[%s1 + $0x8] sm:$0xff]
  %v29 = vld [vmem:[%s1 + $0x10] sm:$0xff]
  %v30 = vld [vmem:[%s1 + $0x18] sm:$0xff]
  %v31 = vld [vmem:[%s1 + $0x20] sm:$0xff]
  %v32 = vld [vmem:[%s1 + $0x28] sm:$0xff]
  %v33 = vld [vmem:[%s1 + $0x30] sm:$0xff]
  %v34 = vld [vmem:[%s1 + $0x38] sm:$0xff]
  %v35 = vld [vmem:[%s1 + $0x40] sm:$0xff]
  %v36 = vld [vmem:[%s1 + $0x48] sm:$0xff]
  %v37 = vld [vmem:[%s1 + $0x50] sm:$0xff]
  %v38 = vld [vmem:[%s1 + $0x58] sm:$0xff]
  %v39 = vld [vmem:[%s1 + $0x60] sm:$0xff]
  %v40 = vld [vmem:[%s1 + $0x68] sm:$0xff]
  %v41 = vld [vmem:[%s1 + $0x70] sm:$0xff]
  %v42 = vld [vmem:[%s1 + $0x78] sm:$0xff]
  %v43 = vsub.f32 %v11, %v27
  %v44 = vsub.f32 %v12, %v28
  %v45 = vsub.f32 %v13, %v29
  %v46 = vsub.f32 %v14, %v30
  %v47 = vsub.f32 %v15, %v31
  %v48 = vsub.f32 %v16, %v32
  %v49 = vsub.f32 %v17, %v33
  %v50 = vsub.f32 %v18, %v34
  %v51 = vsub.f32 %v19, %v35
  %v52 = vsub.f32 %v20, %v36
  %v53 = vsub.f32 %v21, %v37
  %v54 = vsub.f32 %v22, %v38
  %v55 = vsub.f32 %v23, %v39
  %v56 = vsub.f32 %v24, %v40
  %v57 = vsub.f32 %v25, %v41
  %v58 = vsub.f32 %v26, %v42
  %v59 = vmax.f32 %v43, 0.0
  %v60 = vmax.f32 %v44, 0.0
  %v61 = vmax.f32 %v45, 0.0
  %v62 = vmax.f32 %v46, 0.0
  %v63 = vmax.f32 %v47, 0.0
  %v64 = vmax.f32 %v48, 0.0
  %v65 = vmax.f32 %v49, 0.0
  %v66 = vmax.f32 %v50, 0.0
  %v67 = vmax.f32 %v51, 0.0
  %v68 = vmax.f32 %v52, 0.0
  %v69 = vmax.f32 %v53, 0.0
  %v70 = vmax.f32 %v54, 0.0
  %v71 = vmax.f32 %v55, 0.0
  %v72 = vmax.f32 %v56, 0.0
  %v73 = vmax.f32 %v57, 0.0
  %v74 = vmax.f32 %v58, 0.0
  %vm75 = vcmask 130048
  %76 = vst.msk [vmem:[%s2] sm:$0xff] %vm75, %v59
  %77 = vst.msk [vmem:[%s2 + $0x8] sm:$0xff] %vm75, %v60
  %78 = vst.msk [vmem:[%s2 + $0x10] sm:$0xff] %vm75, %v61
  %79 = vst.msk [vmem:[%s2 + $0x18] sm:$0xff] %vm75, %v62
  %80 = vst.msk [vmem:[%s2 + $0x20] sm:$0xff] %vm75, %v63
  %81 = vst.msk [vmem:[%s2 + $0x28] sm:$0xff] %vm75, %v64
  %82 = vst.msk [vmem:[%s2 + $0x30] sm:$0xff] %vm75, %v65
  %83 = vst.msk [vmem:[%s2 + $0x38] sm:$0xff] %vm75, %v66
  %84 = vst.msk [vmem:[%s2 + $0x40] sm:$0xff] %vm75, %v67
  %85 = vst.msk [vmem:[%s2 + $0x48] sm:$0xff] %vm75, %v68
  %86 = vst.msk [vmem:[%s2 + $0x50] sm:$0xff] %vm75, %v69
  %87 = vst.msk [vmem:[%s2 + $0x58] sm:$0xff] %vm75, %v70
  %88 = vst.msk [vmem:[%s2 + $0x60] sm:$0xff] %vm75, %v71
  %89 = vst.msk [vmem:[%s2 + $0x68] sm:$0xff] %vm75, %v72
  %90 = vst.msk [vmem:[%s2 + $0x70] sm:$0xff] %vm75, %v73
  %91 = vst.msk [vmem:[%s2 + $0x78] sm:$0xff] %vm75, %v74
  // Predicated region
  $region10: #{tpu_custom_call.1} parent=0 // pred_check
    _
  $region11: #{tpu_custom_call.1} parent=0 // pred_check_branch
    %93 = sbr.rel (0) target = $region13
  $region12: #{tpu_custom_call.1} parent=0 // pred_region
    _
  $region13: #{tpu_custom_call.1} parent=0 // pred_fallthru
    _
  // Predicated region
  $region14: #{tpu_custom_call.1} parent=0 // pred_check
    _
  $region15: #{tpu_custom_call.1} parent=0 // pred_check_branch
    %95 = sbr.rel (0) target = $region17
  $region16: #{tpu_custom_call.1} parent=0 // pred_region
    _
  $region17: #{tpu_custom_call.1} parent=0 // pred_fallthru
    _

</llo_original>
